<compile_context>
chip_gen: v7x
topology: tpu7x:2x2x1
jax: 0.10.0
libtpu: 0.0.40
codegen_flags: <defaults>
</compile_context>

<pallas_src>
import functools

import jax
import jax.numpy as jnp
from jax import lax
from jax.experimental import pallas as pl
from jax.experimental.pallas import tpu as pltpu

MARGIN = 0.3


def _round_up(x, m):
    return (x + m - 1) // m * m


def _triplet_kernel(xr_ref, xc_ref, sqr_ref, sqc_ref, tr_ref, tc_ref,
                    vr_ref, vc_ref, out_ref, ap_ref, an_ref, *, margin):
    """One (row-tile i, column-tile j) step of hard-mining triplet loss."""
    j = pl.program_id(1)

    @pl.when(j == 0)
    def _():
        ap_ref[...] = jnp.full_like(ap_ref, -jnp.inf)   # hard-positive running max
        an_ref[...] = jnp.full_like(an_ref, jnp.inf)    # hard-negative running min

    xr = xr_ref[...]                                    # (TM, Dp) f32
    xc = xc_ref[...]                                    # (TN, Dp) f32

    # Gram tile on the MXU; contract the feature axis of both operands so no
    # transposed copy of x is ever materialized.
    gram = lax.dot_general(
        xr, xc,
        dimension_numbers=(((1,), (1,)), ((), ())),
        preferred_element_type=jnp.float32)             # (TM, TN)

    # dist[i, j] = sqrt(clamp(|xi|^2 + |xj|^2 - 2 xi.xj, 1e-12))
    dist2 = sqr_ref[...] + sqc_ref[...] - 2.0 * gram    # (TM,1)+(1,TN) broadcast
    dist = jnp.sqrt(jnp.maximum(dist2, 1e-12))          # (TM, TN)

    same = tr_ref[...] == tc_ref[...]                   # (TM, TN) bool
    col_valid = vc_ref[...] != 0                        # (1, TN)  bool

    pos_mask = jnp.logical_and(same, col_valid)
    neg_mask = jnp.logical_and(jnp.logical_not(same), col_valid)

    ap_tile = jnp.max(jnp.where(pos_mask, dist, -jnp.inf), axis=1, keepdims=True)
    an_tile = jnp.min(jnp.where(neg_mask, dist, jnp.inf), axis=1, keepdims=True)

    ap_ref[...] = jnp.maximum(ap_ref[...], ap_tile)
    an_ref[...] = jnp.minimum(an_ref[...], an_tile)

    @pl.when(j == pl.num_programs(1) - 1)
    def _():
        # MarginRankingLoss with y=1: max(0, dist_ap - dist_an + margin).
        row_valid = (vr_ref[...] != 0).astype(jnp.float32)             # (TM, 1)
        hinge = jnp.maximum(ap_ref[...] - an_ref[...] + margin, 0.0)   # (TM, 1)
        partial = jnp.sum(hinge * row_valid)
        # Lane-dense (1, 8, 128) store of the scalar partial sum; the wrapper
        # reads out[:, 0, 0].
        out_ref[...] = jnp.full(out_ref.shape, partial, dtype=jnp.float32)


def triplet_loss_v2(inputs, targets, margin=MARGIN):
    """inputs: (N, D) float features; targets: (N,) int class labels."""
    n, d = inputs.shape
    d_pad = _round_up(d, 128)           # lane-dense feature dim (zeros are free)

    if n <= 256:
        tm = tn = _round_up(max(n, 8), 8)
        n_pad = tm
    else:
        tm, tn = 256, 512               # fits comfortably in v7x's 64 MiB VMEM
        n_pad = _round_up(n, 512)

    # Host/XLA-side layout work (cheap) so the kernel does zero transposes.
    x = jnp.zeros((n_pad, d_pad), jnp.float32).at[:n, :d].set(
        inputs.astype(jnp.float32))
    sq = jnp.sum(x * x, axis=1)                                  # (n_pad,)
    sq_col = sq.reshape(n_pad, 1)
    sq_row = sq.reshape(1, n_pad)

    t = jnp.full((n_pad,), -1, jnp.int32).at[:n].set(targets.astype(jnp.int32))
    t_col = t.reshape(n_pad, 1)
    t_row = t.reshape(1, n_pad)

    valid = (jnp.arange(n_pad) < n).astype(jnp.int32)
    valid_col = valid.reshape(n_pad, 1)   # per-row validity
    valid_row = valid.reshape(1, n_pad)   # per-column validity

    grid = (n_pad // tm, n_pad // tn)

    partial = pl.pallas_call(
        functools.partial(_triplet_kernel, margin=float(margin)),
        out_shape=jax.ShapeDtypeStruct((grid[0], 8, 128), jnp.float32),
        grid_spec=pltpu.PrefetchScalarGridSpec(
            num_scalar_prefetch=0,
            grid=grid,
            in_specs=[
                pl.BlockSpec((tm, d_pad), lambda i, j: (i, 0)),   # x rows
                pl.BlockSpec((tn, d_pad), lambda i, j: (j, 0)),   # x "columns"
                pl.BlockSpec((tm, 1), lambda i, j: (i, 0)),       # |x_i|^2 column
                pl.BlockSpec((1, tn), lambda i, j: (0, j)),       # |x_j|^2 row
                pl.BlockSpec((tm, 1), lambda i, j: (i, 0)),       # labels column
                pl.BlockSpec((1, tn), lambda i, j: (0, j)),       # labels row
                pl.BlockSpec((tm, 1), lambda i, j: (i, 0)),       # row validity
                pl.BlockSpec((1, tn), lambda i, j: (0, j)),       # col validity
            ],
            out_specs=pl.BlockSpec((1, 8, 128), lambda i, j: (i, 0, 0)),
            scratch_shapes=[pltpu.VMEM((tm, 1), jnp.float32),     # dist_ap acc
                            pltpu.VMEM((tm, 1), jnp.float32)],    # dist_an acc
        ),
        compiler_params=pltpu.CompilerParams(
            dimension_semantics=("parallel", "arbitrary")),
        cost_estimate=pl.CostEstimate(
            flops=2 * n_pad * n_pad * d_pad,
            transcendentals=n_pad * n_pad,
            bytes_accessed=4 * (2 * n_pad * d_pad + 6 * n_pad
                                + grid[0] * 8 * 128)),
    )(x, x, sq_col, sq_row, t_col, t_row, valid_col, valid_row)

    return jnp.sum(partial[:, 0, 0]) / jnp.float32(n)


def _reference(inputs, targets, margin=MARGIN):
    """Pure-JAX reference mirroring the PyTorch forward."""
    x = inputs.astype(jnp.float32)
    sq = jnp.sum(x * x, axis=1, keepdims=True)
    dist = sq + sq.T - 2.0 * (x @ x.T)
    dist = jnp.sqrt(jnp.maximum(dist, 1e-12))
    mask = targets[:, None] == targets[None, :]
    dist_ap = jnp.max(jnp.where(mask, dist, -jnp.inf), axis=1)
    dist_an = jnp.min(jnp.where(mask, jnp.inf, dist), axis=1)
    return jnp.mean(jnp.maximum(dist_ap - dist_an + margin, 0.0))


if __name__ == "__main__":
    key = jax.random.PRNGKey(0)
    k_feat, k_lab = jax.random.split(key)

    batch, feat_dim, num_classes = 8, 32, 3
    inputs = jax.random.normal(k_feat, (batch, feat_dim), dtype=jnp.float32)
    targets = jax.random.randint(k_lab, (batch,), 0, num_classes, dtype=jnp.int32)

    loss = triplet_loss_v2(inputs, targets)
    jax.block_until_ready(loss)

    ref = _reference(inputs, targets)
    assert jnp.allclose(loss, ref, atol=1e-4, rtol=1e-4), (loss, ref)

    print("KERNEL_OK")
</pallas_src>

<mosaic_0001>
module attributes {stable_mosaic.version = 11 : i64} {
  func.func @_triplet_kernel(%arg0: i32, %arg1: i32, %arg2: memref<8x128xf32, #tpu.memory_space<vmem>>, %arg3: memref<8x128xf32, #tpu.memory_space<vmem>>, %arg4: memref<8x1xf32, #tpu.memory_space<vmem>>, %arg5: memref<1x8xf32, #tpu.memory_space<vmem>>, %arg6: memref<8x1xi32, #tpu.memory_space<vmem>>, %arg7: memref<1x8xi32, #tpu.memory_space<vmem>>, %arg8: memref<8x1xi32, #tpu.memory_space<vmem>>, %arg9: memref<1x8xi32, #tpu.memory_space<vmem>>, %arg10: memref<1x8x128xf32, #tpu.memory_space<vmem>>, %arg11: memref<8x1xf32, #tpu.memory_space<vmem>>, %arg12: memref<8x1xf32, #tpu.memory_space<vmem>>) attributes {dimension_semantics = [#tpu.dimension_semantics<parallel>, #tpu.dimension_semantics<arbitrary>], iteration_bounds = array<i64: 1, 1>, scalar_prefetch = 0 : i64, scratch_operands = 2 : i64, tpu.core_type = #tpu.core_type<tc>, window_params = [{transform_indices = @transform_0, window_bounds = array<i64: 8, 128>}, {transform_indices = @transform_1, window_bounds = array<i64: 8, 128>}, {transform_indices = @transform_2, window_bounds = array<i64: 8, 1>}, {transform_indices = @transform_3, window_bounds = array<i64: 1, 8>}, {transform_indices = @transform_4, window_bounds = array<i64: 8, 1>}, {transform_indices = @transform_5, window_bounds = array<i64: 1, 8>}, {transform_indices = @transform_6, window_bounds = array<i64: 8, 1>}, {transform_indices = @transform_7, window_bounds = array<i64: 1, 8>}, {transform_indices = @transform_8, window_bounds = array<i64: 1, 8, 128>}]} {
    %c0_i32 = arith.constant 0 : i32
    %0 = arith.cmpi eq, %arg1, %c0_i32 : i32
    %1 = arith.extui %0 : i1 to i32
    %c0_i32_0 = arith.constant 0 : i32
    %2 = arith.cmpi ne, %1, %c0_i32_0 : i32
    scf.if %2 {
      %cst_32 = arith.constant 0xFF800000 : f32
      %47 = vector.broadcast %cst_32 : f32 to vector<8x1xf32>
      %c0_33 = arith.constant 0 : index
      %c0_34 = arith.constant 0 : index
      %48 = vector.load %arg11[%c0_33, %c0_34] : memref<8x1xf32, #tpu.memory_space<vmem>>, vector<8x1xf32>
      tpu.vector_store %arg11[%c0_33, %c0_34], %47 {strides = array<i32>} : memref<8x1xf32, #tpu.memory_space<vmem>>, vector<8x1xf32>,
      %cst_35 = arith.constant 0x7F800000 : f32
      %49 = vector.broadcast %cst_35 : f32 to vector<8x1xf32>
      %c0_36 = arith.constant 0 : index
      %c0_37 = arith.constant 0 : index
      %50 = vector.load %arg12[%c0_36, %c0_37] : memref<8x1xf32, #tpu.memory_space<vmem>>, vector<8x1xf32>
      tpu.vector_store %arg12[%c0_36, %c0_37], %49 {strides = array<i32>} : memref<8x1xf32, #tpu.memory_space<vmem>>, vector<8x1xf32>,
    } else {
    }
    %c0 = arith.constant 0 : index
    %c0_1 = arith.constant 0 : index
    %3 = vector.load %arg2[%c0, %c0_1] : memref<8x128xf32, #tpu.memory_space<vmem>>, vector<8x128xf32>
    %c0_2 = arith.constant 0 : index
    %c0_3 = arith.constant 0 : index
    %4 = vector.load %arg3[%c0_2, %c0_3] : memref<8x128xf32, #tpu.memory_space<vmem>>, vector<8x128xf32>
    %cst = arith.constant dense<0.000000e+00> : vector<8x8xf32>
    %5 = tpu.matmul %3, %4, %cst {dimension_numbers = #tpu.dot_dimension_numbers<[1], [1], [0], [0], [0, 0, 1, 0], [], []>} : vector<8x128xf32>, vector<8x128xf32>, vector<8x8xf32> -> vector<8x8xf32>
    %c0_4 = arith.constant 0 : index
    %c0_5 = arith.constant 0 : index
    %6 = vector.load %arg4[%c0_4, %c0_5] : memref<8x1xf32, #tpu.memory_space<vmem>>, vector<8x1xf32>
    %c0_6 = arith.constant 0 : index
    %c0_7 = arith.constant 0 : index
    %7 = vector.load %arg5[%c0_6, %c0_7] : memref<1x8xf32, #tpu.memory_space<vmem>>, vector<1x8xf32>
    %8 = vector.broadcast %6 : vector<8x1xf32> to vector<8x8xf32>
    %9 = vector.broadcast %7 : vector<1x8xf32> to vector<8x8xf32>
    %10 = arith.addf %8, %9 : vector<8x8xf32>
    %cst_8 = arith.constant 2.000000e+00 : f32
    %11 = vector.broadcast %cst_8 : f32 to vector<8x8xf32>
    %12 = arith.mulf %11, %5 : vector<8x8xf32>
    %13 = arith.subf %10, %12 : vector<8x8xf32>
    %cst_9 = arith.constant 9.99999996E-13 : f32
    %14 = vector.broadcast %cst_9 : f32 to vector<8x8xf32>
    %15 = arith.maximumf %13, %14 : vector<8x8xf32>
    %16 = math.sqrt %15 : vector<8x8xf32>
    %c0_10 = arith.constant 0 : index
    %c0_11 = arith.constant 0 : index
    %17 = vector.load %arg6[%c0_10, %c0_11] : memref<8x1xi32, #tpu.memory_space<vmem>>, vector<8x1xi32>
    %c0_12 = arith.constant 0 : index
    %c0_13 = arith.constant 0 : index
    %18 = vector.load %arg7[%c0_12, %c0_13] : memref<1x8xi32, #tpu.memory_space<vmem>>, vector<1x8xi32>
    %19 = vector.broadcast %17 : vector<8x1xi32> to vector<8x8xi32>
    %20 = vector.broadcast %18 : vector<1x8xi32> to vector<8x8xi32>
    %21 = arith.cmpi eq, %19, %20 : vector<8x8xi32>
    %c0_14 = arith.constant 0 : index
    %c0_15 = arith.constant 0 : index
    %22 = vector.load %arg9[%c0_14, %c0_15] : memref<1x8xi32, #tpu.memory_space<vmem>>, vector<1x8xi32>
    %c0_i32_16 = arith.constant 0 : i32
    %23 = vector.broadcast %c0_i32_16 : i32 to vector<1x8xi32>
    %24 = arith.cmpi ne, %22, %23 : vector<1x8xi32>
    %25 = vector.broadcast %24 : vector<1x8xi1> to vector<8x8xi1>
    %26 = arith.andi %21, %25 : vector<8x8xi1>
    %cst_17 = arith.constant dense<true> : vector<8x8xi1>
    %27 = arith.xori %21, %cst_17 : vector<8x8xi1>
    %28 = vector.broadcast %24 : vector<1x8xi1> to vector<8x8xi1>
    %29 = arith.andi %27, %28 : vector<8x8xi1>
    %cst_18 = arith.constant 0xFF800000 : f32
    %30 = vector.broadcast %cst_18 : f32 to vector<8x8xf32>
    %31 = arith.select %26, %16, %30 : vector<8x8xi1>, vector<8x8xf32>
    %cst_19 = arith.constant dense<0xFF800000> : vector<8xf32>
    %32 = vector.multi_reduction <maximumf>, %31, %cst_19 [1] : vector<8x8xf32> to vector<8xf32>
    %33 = vector.shape_cast %32 : vector<8xf32> to vector<8x1xf32>
    %cst_20 = arith.constant 0x7F800000 : f32
    %34 = vector.broadcast %cst_20 : f32 to vector<8x8xf32>
    %35 = arith.select %29, %16, %34 : vector<8x8xi1>, vector<8x8xf32>
    %cst_21 = arith.constant dense<0x7F800000> : vector<8xf32>
    %36 = vector.multi_reduction <minimumf>, %35, %cst_21 [1] : vector<8x8xf32> to vector<8xf32>
    %37 = vector.shape_cast %36 : vector<8xf32> to vector<8x1xf32>
    %c0_22 = arith.constant 0 : index
    %c0_23 = arith.constant 0 : index
    %38 = vector.load %arg11[%c0_22, %c0_23] : memref<8x1xf32, #tpu.memory_space<vmem>>, vector<8x1xf32>
    %39 = arith.maximumf %38, %33 : vector<8x1xf32>
    %c0_24 = arith.constant 0 : index
    %c0_25 = arith.constant 0 : index
    %40 = vector.load %arg11[%c0_24, %c0_25] : memref<8x1xf32, #tpu.memory_space<vmem>>, vector<8x1xf32>
    tpu.vector_store %arg11[%c0_24, %c0_25], %39 {strides = array<i32>} : memref<8x1xf32, #tpu.memory_space<vmem>>, vector<8x1xf32>,
    %c0_26 = arith.constant 0 : index
    %c0_27 = arith.constant 0 : index
    %41 = vector.load %arg12[%c0_26, %c0_27] : memref<8x1xf32, #tpu.memory_space<vmem>>, vector<8x1xf32>
    %42 = arith.minimumf %41, %37 : vector<8x1xf32>
    %c0_28 = arith.constant 0 : index
    %c0_29 = arith.constant 0 : index
    %43 = vector.load %arg12[%c0_28, %c0_29] : memref<8x1xf32, #tpu.memory_space<vmem>>, vector<8x1xf32>
    tpu.vector_store %arg12[%c0_28, %c0_29], %42 {strides = array<i32>} : memref<8x1xf32, #tpu.memory_space<vmem>>, vector<8x1xf32>,
    %c0_i32_30 = arith.constant 0 : i32
    %44 = arith.cmpi eq, %arg1, %c0_i32_30 : i32
    %45 = arith.extui %44 : i1 to i32
    %c0_i32_31 = arith.constant 0 : i32
    %46 = arith.cmpi ne, %45, %c0_i32_31 : i32
    scf.if %46 {
      %c0_32 = arith.constant 0 : index
      %c0_33 = arith.constant 0 : index
      %47 = vector.load %arg8[%c0_32, %c0_33] : memref<8x1xi32, #tpu.memory_space<vmem>>, vector<8x1xi32>
      %c0_i32_34 = arith.constant 0 : i32
      %48 = vector.broadcast %c0_i32_34 : i32 to vector<8x1xi32>
      %49 = arith.cmpi ne, %47, %48 : vector<8x1xi32>
      %50 = arith.extui %49 : vector<8x1xi1> to vector<8x1xi32>
      %51 = arith.sitofp %50 : vector<8x1xi32> to vector<8x1xf32>
      %c0_35 = arith.constant 0 : index
      %c0_36 = arith.constant 0 : index
      %52 = vector.load %arg11[%c0_35, %c0_36] : memref<8x1xf32, #tpu.memory_space<vmem>>, vector<8x1xf32>
      %c0_37 = arith.constant 0 : index
      %c0_38 = arith.constant 0 : index
      %53 = vector.load %arg12[%c0_37, %c0_38] : memref<8x1xf32, #tpu.memory_space<vmem>>, vector<8x1xf32>
      %54 = arith.subf %52, %53 : vector<8x1xf32>
      %cst_39 = arith.constant 3.000000e-01 : f32
      %55 = vector.broadcast %cst_39 : f32 to vector<8x1xf32>
      %56 = arith.addf %54, %55 : vector<8x1xf32>
      %cst_40 = arith.constant 0.000000e+00 : f32
      %57 = vector.broadcast %cst_40 : f32 to vector<8x1xf32>
      %58 = arith.maximumf %56, %57 : vector<8x1xf32>
      %59 = arith.mulf %58, %51 : vector<8x1xf32>
      %60 = vector.shape_cast %59 : vector<8x1xf32> to vector<1x8x1xf32>
      %cst_41 = arith.constant dense<0.000000e+00> : vector<1xf32>
      %61 = vector.multi_reduction <add>, %60, %cst_41 [1, 2] : vector<1x8x1xf32> to vector<1xf32>
      %62 = vector.shape_cast %61 : vector<1xf32> to vector<1x1x1xf32>
      %63 = vector.extract %62[0, 0, 0] : f32 from vector<1x1x1xf32>
      %64 = vector.broadcast %63 : f32 to vector<1x8x128xf32>
      %c0_42 = arith.constant 0 : index
      %c0_43 = arith.constant 0 : index
      %c0_44 = arith.constant 0 : index
      %65 = vector.load %arg10[%c0_42, %c0_43, %c0_44] : memref<1x8x128xf32, #tpu.memory_space<vmem>>, vector<1x8x128xf32>
      tpu.vector_store %arg10[%c0_42, %c0_43, %c0_44], %64 {strides = array<i32>} : memref<1x8x128xf32, #tpu.memory_space<vmem>>, vector<1x8x128xf32>,
    } else {
    }
    return
  }
  func.func @transform_0(%arg0: i32, %arg1: i32) -> (i32, i32) {
    %c0_i32 = arith.constant 0 : i32
    %c0_i32_0 = arith.constant 0 : i32
    return %arg0, %c0_i32 : i32, i32
  }
  func.func @transform_1(%arg0: i32, %arg1: i32) -> (i32, i32) {
    %c0_i32 = arith.constant 0 : i32
    %c0_i32_0 = arith.constant 0 : i32
    return %arg1, %c0_i32 : i32, i32
  }
  func.func @transform_2(%arg0: i32, %arg1: i32) -> (i32, i32) {
    %c0_i32 = arith.constant 0 : i32
    %c0_i32_0 = arith.constant 0 : i32
    return %arg0, %c0_i32 : i32, i32
  }
  func.func @transform_3(%arg0: i32, %arg1: i32) -> (i32, i32) {
    %c0_i32 = arith.constant 0 : i32
    %c0_i32_0 = arith.constant 0 : i32
    return %c0_i32, %arg1 : i32, i32
  }
  func.func @transform_4(%arg0: i32, %arg1: i32) -> (i32, i32) {
    %c0_i32 = arith.constant 0 : i32
    %c0_i32_0 = arith.constant 0 : i32
    return %arg0, %c0_i32 : i32, i32
  }
  func.func @transform_5(%arg0: i32, %arg1: i32) -> (i32, i32) {
    %c0_i32 = arith.constant 0 : i32
    %c0_i32_0 = arith.constant 0 : i32
    return %c0_i32, %arg1 : i32, i32
  }
  func.func @transform_6(%arg0: i32, %arg1: i32) -> (i32, i32) {
    %c0_i32 = arith.constant 0 : i32
    %c0_i32_0 = arith.constant 0 : i32
    return %arg0, %c0_i32 : i32, i32
  }
  func.func @transform_7(%arg0: i32, %arg1: i32) -> (i32, i32) {
    %c0_i32 = arith.constant 0 : i32
    %c0_i32_0 = arith.constant 0 : i32
    return %c0_i32, %arg1 : i32, i32
  }
  func.func @transform_8(%arg0: i32, %arg1: i32) -> (i32, i32, i32) {
    %c0_i32 = arith.constant 0 : i32
    %c0_i32_0 = arith.constant 0 : i32
    %c0_i32_1 = arith.constant 0 : i32
    return %arg0, %c0_i32, %c0_i32_0 : i32, i32, i32
  }
}

</mosaic_0001>

<llo_original>
// kernel: tpu_custom_call.1
$region0: #{tpu_custom_call.1}
  #allocation0 [shape = 'u32[]', space=smem, size = 0x4, offset = 0x4, fixed_abs, tag = 'smem constant byte address 0x4 - core index']
  #allocation1 [shape = 'u32[144,128]{1,0:T(1,128)}', space=vmem, size = 0x12000, scoped, tag = 'internal scratch']
  #allocation2 [shape = 'f32[8,1]{1,0:T(8,128)}', space=vmem, size = 0x1000, scoped, tag = 'scratch operand']
  #allocation3 [shape = 'f32[8,1]{1,0:T(8,128)}', space=vmem, size = 0x1000, scoped, tag = 'scratch operand']
  %s0 = inlined_call_operand.vmem [shape: f32[8,128], index: 0, kind: input, shape index: {}]
  %s1 = inlined_call_operand.vmem [shape: f32[8,128], index: 1, kind: input, shape index: {}]
  %s2 = inlined_call_operand.vmem [shape: f32[8,1], index: 2, kind: input, shape index: {}]
  %s3 = inlined_call_operand.vmem [shape: f32[1,8], index: 3, kind: input, shape index: {}]
  %s4 = inlined_call_operand.vmem [shape: s32[8,1], index: 4, kind: input, shape index: {}]
  %s5 = inlined_call_operand.vmem [shape: s32[1,8], index: 5, kind: input, shape index: {}]
  %s6 = inlined_call_operand.vmem [shape: s32[8,1], index: 6, kind: input, shape index: {}]
  %s7 = inlined_call_operand.vmem [shape: s32[1,8], index: 7, kind: input, shape index: {}]
  %s8 = inlined_call_operand.hbm [shape: f32[1,8,128], index: 8, kind: output, shape index: {}]
  %s9 = sld [smem:[#allocation0]]
  $region50: #{tpu_custom_call.1} parent=0
    _
  %s11 = ssub.s32 1, %s9
  %s12 = scalar_select 0, %s11, %s9
  $region1: #{tpu_custom_call.1} parent=0
    #allocation4 [shape = 'u8[4096]{0}', space=vmem, size = 0x1000, scoped, tag = 'output window, operand 0, single buffered']
    #allocation5 [shape = 's32[1]{0}', space=sflag, size = 0x4, scoped, tag = 'scoped memory for tpu_custom_call.1']
    %13 = vsyncpa [#allocation5], 0
    // Predicated region
    $region2: #{tpu_custom_call.1} parent=1 // pred_check
      _
    $region3: #{tpu_custom_call.1} parent=1 // pred_check_branch
      %15 = sbr.rel (0) target = $region5
    $region4: #{tpu_custom_call.1} parent=1 // pred_region
      _
    $region5: #{tpu_custom_call.1} parent=1 // pred_fallthru
      _
    // Predicated region
    $region6: #{tpu_custom_call.1} parent=1 // pred_check
      _
    $region7: #{tpu_custom_call.1} parent=1 // pred_check_branch
      %17 = sbr.rel (0) target = $region9
    $region8: #{tpu_custom_call.1} parent=1 // pred_region
      _
    $region9: #{tpu_custom_call.1} parent=1 // pred_fallthru
      _
    // Predicated region
    $region10: #{tpu_custom_call.1} parent=1 // pred_check
      _
    $region11: #{tpu_custom_call.1} parent=1 // pred_check_branch
      %19 = sbr.rel (0) target = $region13
    $region12: #{tpu_custom_call.1} parent=1 // pred_region
      _
    $region13: #{tpu_custom_call.1} parent=1 // pred_fallthru
      _
    // Predicated region
    $region14: #{tpu_custom_call.1} parent=1 // pred_check
      _
    $region15: #{tpu_custom_call.1} parent=1 // pred_check_branch
      %21 = sbr.rel (0) target = $region17
    $region16: #{tpu_custom_call.1} parent=1 // pred_region
      _
    $region17: #{tpu_custom_call.1} parent=1 // pred_fallthru
      _
    // Predicated region
    $region18: #{tpu_custom_call.1} parent=1 // pred_check
      _
    $region19: #{tpu_custom_call.1} parent=1 // pred_check_branch
      %23 = sbr.rel (0) target = $region21
    $region20: #{tpu_custom_call.1} parent=1 // pred_region
      _
    $region21: #{tpu_custom_call.1} parent=1 // pred_fallthru
      _
    // Predicated region
    $region22: #{tpu_custom_call.1} parent=1 // pred_check
      _
    $region23: #{tpu_custom_call.1} parent=1 // pred_check_branch
      %25 = sbr.rel (0) target = $region25
    $region24: #{tpu_custom_call.1} parent=1 // pred_region
      _
    $region25: #{tpu_custom_call.1} parent=1 // pred_fallthru
      _
    // Predicated region
    $region26: #{tpu_custom_call.1} parent=1 // pred_check
      _
    $region27: #{tpu_custom_call.1} parent=1 // pred_check_branch
      %27 = sbr.rel (0) target = $region29
    $region28: #{tpu_custom_call.1} parent=1 // pred_region
      _
    $region29: #{tpu_custom_call.1} parent=1 // pred_fallthru
      _
    // Predicated region
    $region30: #{tpu_custom_call.1} parent=1 // pred_check
      _
    $region31: #{tpu_custom_call.1} parent=1 // pred_check_branch
      %29 = sbr.rel (0) target = $region33
    $region32: #{tpu_custom_call.1} parent=1 // pred_region
      _
    $region33: #{tpu_custom_call.1} parent=1 // pred_fallthru
      _
    %p30 = scmp.eq.s32.totalorder 0, 0
    // Predicated region
    $region34: #{tpu_custom_call.1} parent=1 // pred_check
      %p31 = pneg %p30
    $region35: #{tpu_custom_call.1} parent=1 // pred_check_branch
      %33 = sbr.rel (%p31) target = $region37
    $region36: #{tpu_custom_call.1} parent=1 // pred_region
      %vm34 = vcmask 7168
      %35 = vst.msk [vmem:[#allocation2] sm:$0xff] %vm34, -inf
      %36 = vst.msk [vmem:[#allocation3] sm:$0xff] %vm34, inf
    $region37: #{tpu_custom_call.1} parent=1 // pred_fallthru
      _
    %v37 = vld [vmem:[%s0] sm:$0xff]
    %v38 = vld [vmem:[%s1] sm:$0xff]
    %39 = vmatprep.subr.mxu0 0.0
    %40 = vmatpush1.xpose.msra.mxu0 %v38
    %41 = vmatprep.subr.mxu0 0.0
    %42 = vmatpush1.xpose.msra.mxu0 0.0
    %43 = vmatprep.subr.mxu0 0.0
    %44 = vmatpush1.xpose.msra.mxu0 0.0
    %45 = vmatprep.subr.mxu0 0.0
    %46 = vmatpush1.xpose.msra.mxu0 0.0
    %47 = vmatprep.subr.mxu0 0.0
    %48 = vmatpush1.xpose.msra.mxu0 0.0
    %49 = vmatprep.subr.mxu0 0.0
    %50 = vmatpush1.xpose.msra.mxu0 0.0
    %51 = vmatprep.subr.mxu0 0.0
    %52 = vmatpush1.xpose.msra.mxu0 0.0
    %53 = vmatprep.subr.mxu0 0.0
    %54 = vmatpush1.xpose.msra.mxu0 0.0
    %55 = vmatprep.subr.mxu0 0.0
    %56 = vmatpush1.xpose.msra.mxu0 0.0
    %57 = vmatprep.subr.mxu0 0.0
    %58 = vmatpush1.xpose.msra.mxu0 0.0
    %59 = vmatprep.subr.mxu0 0.0
    %60 = vmatpush1.xpose.msra.mxu0 0.0
    %61 = vmatprep.subr.mxu0 0.0
    %62 = vmatpush1.xpose.msra.mxu0 0.0
    %63 = vmatprep.subr.mxu0 0.0
    %64 = vmatpush1.xpose.msra.mxu0 0.0
    %65 = vmatprep.subr.mxu0 0.0
    %66 = vmatpush1.xpose.msra.mxu0 0.0
    %67 = vmatprep.subr.mxu0 0.0
    %68 = vmatpush1.xpose.msra.mxu0 0.0
    %69 = vmatprep.subr.mxu0 0.0
    %70 = vmatpush1.xpose.msra.mxu0 0.0
    %71 = vmatprep.subr.mxu0 0.0
    %72 = vmatpush1.xpose.msra.mxu0 0.0
    %73 = vmatprep.subr.mxu0 0.0
    %74 = vmatpush1.xpose.msra.mxu0 0.0
    %75 = vmatprep.subr.mxu0 0.0
    %76 = vmatpush1.xpose.msra.mxu0 0.0
    %77 = vmatprep.subr.mxu0 0.0
    %78 = vmatpush1.xpose.msra.mxu0 0.0
    %79 = vmatprep.subr.mxu0 0.0
    %80 = vmatpush1.xpose.msra.mxu0 0.0
    %81 = vmatprep.subr.mxu0 0.0
    %82 = vmatpush1.xpose.msra.mxu0 0.0
    %83 = vmatprep.subr.mxu0 0.0
    %84 = vmatpush1.xpose.msra.mxu0 0.0
    %85 = vmatprep.subr.mxu0 0.0
    %86 = vmatpush1.xpose.msra.mxu0 0.0
    %87 = vmatprep.subr.mxu0 0.0
    %88 = vmatpush1.xpose.msra.mxu0 0.0
    %89 = vmatprep.subr.mxu0 0.0
    %90 = vmatpush1.xpose.msra.mxu0 0.0
    %91 = vmatprep.subr.mxu0 0.0
    %92 = vmatpush1.xpose.msra.mxu0 0.0
    %93 = vmatprep.subr.mxu0 0.0
    %94 = vmatpush1.xpose.msra.mxu0 0.0
    %95 = vmatprep.subr.mxu0 0.0
    %96 = vmatpush1.xpose.msra.mxu0 0.0
    %97 = vmatprep.subr.mxu0 0.0
    %98 = vmatpush1.xpose.msra.mxu0 0.0
    %99 = vmatprep.subr.mxu0 0.0
    %100 = vmatpush1.xpose.msra.mxu0 0.0
    %101 = vmatprep.subr.mxu0 0.0
    %102 = vmatpush1.xpose.msra.mxu0 0.0
    %103 = vmatprep.mubr.f32.mxu0 0.0
    %104 = vmatmul.mubr.f32.gmra.mrb[0].mxu0 %v37
    %v105 = vpop.f32.mrb[0].mxu0
    %v106 = vadd.f32 0.0, %v105
    %v107 = vpop.f32.mrb[0].mxu0
    %108 = vdwg.mxu0
    %v109 = vld [vmem:[%s2] sm:$0xff]
    %v110 = vld [vmem:[%s3] sm:$0x1]
    %112 = vset.pattern.permute.xlu0 0
    %113 = vperm.xlu0 %112, %v109
    %v114 = vpop.permute.xlu0 %113
    %v117 = vlaneseq
    %v118 = vshrl.u32 %v117, 7
    %v119 = vsub.s32 0, %v118
    %v120 = vrot.slane %v110, %v119
    %v122 = vadd.f32 %v114, %v120
    %v123 = vmul.f32 %v106, 2.0
    %v124 = vsub.f32 %v122, %v123
    %v125 = vmax.f32 %v124, 1e-12
    %v126 = vrsqrt.pop %v125
    %v127 = vmul.f32 %v125, %v126
    %vm128 = vcmp.eq.f32.partialorder %v125, inf
    %v129 = vsel %vm128, %v125, %v127
    %vm130 = vcmp.eq.f32.partialorder %v125, 0.0
    %v131 = vand.u32 %v125, 2147483648
    %v132 = vsel %vm130, %v131, %v129
    %v133 = vld [vmem:[%s4] sm:$0xff]
    %v134 = vld [vmem:[%s5] sm:$0x1]
    %135 = vset.pattern.permute.xlu0 0
    %136 = vperm.xlu0 %135, %v133
    %v137 = vpop.permute.xlu0 %136
    %v138 = vlaneseq
    %v139 = vshrl.u32 %v138, 7
    %v140 = vsub.s32 0, %v139
    %v141 = vrot.slane %v134, %v140
    %vm142 = vcmp.eq.s32.totalorder %v137, %v141
    %v143 = vld [vmem:[%s7] sm:$0x1]
    %vm144 = vcmp.ne.s32.totalorder %v143, 0
    %v145 = vsel %vm144, 1, 0
    %v146 = vlaneseq
    %v147 = vshrl.u32 %v146, 7
    %v148 = vsub.s32 0, %v147
    %v149 = vrot.slane %v145, %v148
    %vm150 = vcmp.eq.s32.totalorder %v149, 1
    %vm151 = vmand %vm142, %vm150
    %vm152 = vmxor %vm142, 1
    %vm153 = vmand %vm152, %vm150
    %v154 = vsel %vm151, %v132, -inf
    %vm155 = vcmask 64512
    %v156 = vsel %vm155, %v154, -inf
    %157 = vmax.xlane.f32.xlu0 %v156
    %v158 = vpop.xlane.xlu0 %157
    %v159 = vsel %vm153, %v132, inf
    %v160 = vsel %vm155, %v159, inf
    %161 = vmin.xlane.f32.xlu0 %v160
    %v162 = vpop.xlane.xlu0 %161
    %v163 = vld [vmem:[#allocation2] sm:$0xff]
    %v164 = vmax.f32 %v163, %v158
    %vm165 = vcmask 7168
    %166 = vst.msk [vmem:[#allocation2] sm:$0xff] %vm165, %v164
    %v167 = vld [vmem:[#allocation3] sm:$0xff]
    %v168 = vmin.f32 %v167, %v162
    %169 = vst.msk [vmem:[#allocation3] sm:$0xff] %vm165, %v168
    // Predicated region
    $region38: #{tpu_custom_call.1} parent=1 // pred_check
      %p170 = pneg %p30
    $region39: #{tpu_custom_call.1} parent=1 // pred_check_branch
      %172 = sbr.rel (%p170) target = $region41
    $region40: #{tpu_custom_call.1} parent=1 // pred_region
      %v173 = vld [vmem:[%s6] sm:$0xff]
      %vm174 = vcmp.ne.s32.totalorder %v173, 0
      %v175 = vsel %vm174, 1, 0
      %v176 = vcvt.s32.f32 %v175
      %v177 = vld [vmem:[#allocation2] sm:$0xff]
      %v178 = vld [vmem:[#allocation3] sm:$0xff]
      %v179 = vsub.f32 %v177, %v178
      %v180 = vadd.f32 %v179, 0.3
      %v181 = vmax.f32 %v180, 0.0
      %v182 = vmul.f32 %v181, %v176
      %v183 = vsel %vm165, %v182, 0.0
      %184 = vadd.xlane.f32.xlu0 %v183
      %v185 = vpop.xlane.xlu0 %184
      %v186 = vrot.slane %v185, 4
      %v187 = vadd.f32 %v185, %v186
      %v188 = vrot.slane %v187, 2
      %v189 = vadd.f32 %v187, %v188
      %v190 = vrot.slane %v189, 1
      %v191 = vadd.f32 %v189, %v190
      %s192 = vtos %v191
      %v193 = vstv %s192
      %194 = vst [vmem:[#allocation4] sm:$0xff] %v193
    $region41: #{tpu_custom_call.1} parent=1 // pred_fallthru
      _
    // Predicated region
    $region42: #{tpu_custom_call.1} parent=1 // pred_check
      _
    $region43: #{tpu_custom_call.1} parent=1 // pred_check_branch
      %196 = sbr.rel (0) target = $region45
    $region44: #{tpu_custom_call.1} parent=1 // pred_region
      %s198 = ssub.s32 128, 128
      %199 = vsyncadd [#allocation5], %s198
      %s201 = sshll.u32 [#allocation4], 4
      %s202 = int_to_ptr.vmem [resolvable:$true] %s201
      %204 = dma.vmem_to_hbm [thread:$0]  %s202, 128, %s8, [#allocation5]
    $region45: #{tpu_custom_call.1} parent=1 // pred_fallthru
      _
    // Predicated region
    $region46: #{tpu_custom_call.1} parent=1 // pred_check
      _
    $region47: #{tpu_custom_call.1} parent=1 // pred_check_branch
      %206 = sbr.rel (0) target = $region49
    $region48: #{tpu_custom_call.1} parent=1 // pred_region
      %207 = dma.done [#allocation5], 128
    $region49: #{tpu_custom_call.1} parent=1 // pred_fallthru
      _
    %208 = vsyncpa [#allocation5], 1

</llo_original>
